<compile_context>
chip_gen: v5e
topology: v5e:2x2
jax: 0.10.0
libtpu: 0.0.40
codegen_flags: <defaults>
</compile_context>

<pallas_src>
import math

import jax
import jax.numpy as jnp
from jax.experimental import pallas as pl
from jax.experimental.pallas import tpu as pltpu

_LANES = 128
_SUBLANES = 8
_MIN_TILE = _SUBLANES * _LANES          # 1024 lanes -> every tile is (8,128)-aligned
_TWO_LOG_2PI = 2.0 * math.log(2.0 * math.pi)
_VMEM_LIMIT = 32 * 1024 * 1024          # > v5e's 16 MiB default, < v7x's 64 MiB physical


def _round_up(n, m):
    return ((n + m - 1) // m) * m


def _quad_plus_logdet(f_ref):
    """Per-sample (quadratic + log|Sigma|) for one tile.

    f_ref: (6, TR, 128) component-major planes:
      [0]=x0-mu0, [1]=x1-mu1, [2]=L00, [3]=L01 (unused), [4]=L10, [5]=L11.
    """
    d0, d1 = f_ref[0], f_ref[1]
    l00, l10, l11 = f_ref[2], f_ref[4], f_ref[5]

    det = l00 * l11                           # > 0 for a valid Cholesky factor
    # Exact f32 division (NOT pl.reciprocal(approx=True)): per-sample accuracy matters.
    inv_det = 1.0 / det
    y0 = (l11 * d0) * inv_det                 # == d0 / L00
    y1 = (l00 * d1 - l10 * d0) * inv_det      # == (d1 - L10*y0) / L11
    quad = y0 * y0 + y1 * y1

    # NOTE: log(det) may under/overflow f32 for extreme diagonal magnitudes where
    # log(L00)+log(L11) would not; fine for typical scales (single log per group).
    return quad + 2.0 * jnp.log(det)          # (TR, 128)


def _nll_kernel(f_ref, o_ref):
    # reduce=False: lane+sublane-dense per-sample store (unmasked full vst).
    o_ref[...] = 0.5 * (_quad_plus_logdet(f_ref) + _TWO_LOG_2PI)


def _nll_partial_sum_kernel(f_ref, psum_ref):
    # reduce=True: per-split running sum of (quad + log_det); padded lanes
    # (diff=0, L=I) contribute exactly 0, so no mask is needed.  Constants,
    # the 0.5 scale and the /B are applied analytically in the wrapper.
    t = pl.program_id(1)

    @pl.when(t == 0)
    def _():
        psum_ref[...] = jnp.zeros_like(psum_ref)

    core = _quad_plus_logdet(f_ref)                                   # (TR, 128)
    tr = core.shape[0]
    # Fold the tile onto one (8,128) vreg with pure VPU adds (no per-step XLU).
    psum_ref[...] += core.reshape(tr // _SUBLANES, _SUBLANES, _LANES).sum(axis=0)


def gaussian_nll_loss_2d(mu, L, x, reduce=True, *, max_tile_lanes=262144, n_splits=2):
    """mu, x: (B, 2) float32;  L: (B, 2, 2) lower-triangular Cholesky factor of Sigma."""
    mu = jnp.asarray(mu, jnp.float32)
    x = jnp.asarray(x, jnp.float32)
    L = jnp.asarray(L, jnp.float32)
    B, D = mu.shape
    assert D == 2 and x.shape == (B, D) and L.shape == (B, D, D)
    assert max_tile_lanes % _MIN_TILE == 0 and n_splits >= 1

    NC = D + D * D                                        # 6 component planes
    TB = min(_round_up(B, _MIN_TILE), max_tile_lanes)     # batch lanes per grid step
    TR = TB // _LANES                                     # sublane rows per step
    n_tiles = pl.cdiv(B, TB)

    if reduce:
        splits = min(n_splits, n_tiles)                   # v7x: both TCs stream HBM
        tiles_per_split = pl.cdiv(n_tiles, splits)
        total_tiles = splits * tiles_per_split
    else:
        splits, tiles_per_split, total_tiles = 1, n_tiles, n_tiles
    B_pad = total_tiles * TB
    rows = B_pad // _LANES

    # Single fused producer: concat -> (pad) -> transpose -> reshape into a
    # component-major (NC, rows, 128) slab.  Padded samples get diff=0, L=I so
    # they are numerically safe and contribute exactly 0 to the reduction.
    feat = jnp.concatenate([x - mu, L.reshape(B, D * D)], axis=1)       # (B, 6)
    if B_pad > B:
        pad_row = jnp.concatenate(
            [jnp.zeros((D,), jnp.float32), jnp.eye(D, dtype=jnp.float32).reshape(-1)])
        feat = jnp.concatenate(
            [feat, jnp.broadcast_to(pad_row, (B_pad - B, NC))], axis=0)
    planes = feat.T.reshape(NC, rows, _LANES)

    if reduce:
        partial = pl.pallas_call(
            _nll_partial_sum_kernel,
            out_shape=jax.ShapeDtypeStruct((splits * _SUBLANES, _LANES), jnp.float32),
            grid=(splits, tiles_per_split),
            in_specs=[pl.BlockSpec((NC, TR, _LANES),
                                   lambda s, t: (0, s * tiles_per_split + t, 0))],
            out_specs=pl.BlockSpec((_SUBLANES, _LANES), lambda s, t: (s, 0)),
            compiler_params=pltpu.CompilerParams(
                dimension_semantics=("parallel", "arbitrary"),
                vmem_limit_bytes=_VMEM_LIMIT),
            cost_estimate=pl.CostEstimate(
                flops=16 * B_pad,
                transcendentals=2 * B_pad,
                bytes_accessed=NC * B_pad * 4 + splits * _SUBLANES * _LANES * 4),
        )(planes)
        # Tiny final fold (at most n_splits*4 KiB) + analytic constants / true B.
        return 0.5 * (jnp.sum(partial) / B + _TWO_LOG_2PI)

    out = pl.pallas_call(
        _nll_kernel,
        out_shape=jax.ShapeDtypeStruct((rows, _LANES), jnp.float32),
        grid=(n_tiles,),
        in_specs=[pl.BlockSpec((NC, TR, _LANES), lambda i: (0, i, 0))],
        out_specs=pl.BlockSpec((TR, _LANES), lambda i: (i, 0)),
        compiler_params=pltpu.CompilerParams(
            dimension_semantics=("parallel",),
            vmem_limit_bytes=_VMEM_LIMIT),
        cost_estimate=pl.CostEstimate(
            flops=16 * B_pad,
            transcendentals=2 * B_pad,
            bytes_accessed=(NC + 1) * B_pad * 4),
    )(planes)
    return out.reshape(B_pad)[:B]


def _reference(mu, L, x, reduce=True):
    # Pure-JAX reference mirroring the PyTorch module exactly.
    diff = (x - mu)[..., None]                                    # (B, D, 1)
    y = jax.scipy.linalg.solve_triangular(L, diff, lower=True)    # L y = diff
    quad = jnp.sum(y * y, axis=(1, 2))                            # (B,)
    log_det = 2.0 * jnp.sum(jnp.log(jnp.diagonal(L, axis1=1, axis2=2)), axis=1)
    nll = 0.5 * (quad + log_det + _TWO_LOG_2PI)
    return jnp.mean(nll) if reduce else nll


if __name__ == "__main__":
    def make_inputs(key, B, D=2):
        k1, k2, k3, k4 = jax.random.split(key, 4)
        mu = jax.random.normal(k1, (B, D), jnp.float32)
        x = jax.random.normal(k2, (B, D), jnp.float32)
        raw = jax.random.normal(k3, (B, D, D), jnp.float32) * 0.3
        diag = jnp.exp(jax.random.normal(k4, (B, D), jnp.float32) * 0.2)
        L = jnp.tril(raw, -1) + jnp.eye(D, dtype=jnp.float32)[None] * diag[:, :, None]
        return mu, L, x

    key = jax.random.PRNGKey(0)
    k_a, k_b, k_c = jax.random.split(key, 3)
    ATOL = RTOL = 1e-3

    # Case 1: B not a multiple of the tile -> exercises padding (single tile).
    B = 300
    mu, L, x = make_inputs(k_a, B)
    loss = jax.block_until_ready(gaussian_nll_loss_2d(mu, L, x, reduce=True))
    assert jnp.allclose(loss, _reference(mu, L, x, True), atol=ATOL, rtol=RTOL)
    nll = jax.block_until_ready(gaussian_nll_loss_2d(mu, L, x, reduce=False))
    assert nll.shape == (B,)
    assert jnp.allclose(nll, _reference(mu, L, x, False), atol=ATOL, rtol=RTOL)

    # Case 2: multiple grid tiles (small max_tile_lanes) -> exercises the 2-split
    # "parallel" reduction grid and the multi-tile pipelined per-sample path.
    B = 3000
    mu, L, x = make_inputs(k_b, B)
    loss = jax.block_until_ready(
        gaussian_nll_loss_2d(mu, L, x, reduce=True, max_tile_lanes=1024))
    assert jnp.allclose(loss, _reference(mu, L, x, True), atol=ATOL, rtol=RTOL)
    nll = jax.block_until_ready(
        gaussian_nll_loss_2d(mu, L, x, reduce=False, max_tile_lanes=1024))
    assert nll.shape == (B,)
    assert jnp.allclose(nll, _reference(mu, L, x, False), atol=ATOL, rtol=RTOL)

    # Case 3: exact multiple of the tile -> no padding, splits==tiles.
    B = 2048
    mu, L, x = make_inputs(k_c, B)
    loss = jax.block_until_ready(
        gaussian_nll_loss_2d(mu, L, x, reduce=True, max_tile_lanes=1024))
    assert jnp.allclose(loss, _reference(mu, L, x, True), atol=ATOL, rtol=RTOL)
    nll = jax.block_until_ready(
        gaussian_nll_loss_2d(mu, L, x, reduce=False, max_tile_lanes=1024))
    assert nll.shape == (B,)
    assert jnp.allclose(nll, _reference(mu, L, x, False), atol=ATOL, rtol=RTOL)

    print("KERNEL_OK")
</pallas_src>

<mosaic_0001>
module attributes {stable_mosaic.version = 11 : i64} {
  func.func @_nll_partial_sum_kernel(%arg0: i32, %arg1: i32, %arg2: memref<6x8x128xf32, #tpu.memory_space<vmem>>, %arg3: memref<8x128xf32, #tpu.memory_space<vmem>>) attributes {dimension_semantics = [#tpu.dimension_semantics<parallel>, #tpu.dimension_semantics<arbitrary>], iteration_bounds = array<i64: 1, 1>, scalar_prefetch = 0 : i64, scratch_operands = 0 : i64, tpu.core_type = #tpu.core_type<tc>, window_params = [{transform_indices = @transform_0, window_bounds = array<i64: 6, 8, 128>}, {transform_indices = @transform_1, window_bounds = array<i64: 8, 128>}]} {
    %c0_i32 = arith.constant 0 : i32
    %0 = arith.cmpi eq, %arg1, %c0_i32 : i32
    %1 = arith.extui %0 : i1 to i32
    %c0_i32_0 = arith.constant 0 : i32
    %2 = arith.cmpi ne, %1, %c0_i32_0 : i32
    scf.if %2 {
      %cst_17 = arith.constant 0.000000e+00 : f32
      %34 = vector.broadcast %cst_17 : f32 to vector<8x128xf32>
      %c0_18 = arith.constant 0 : index
      %c0_19 = arith.constant 0 : index
      %35 = vector.load %arg3[%c0_18, %c0_19] : memref<8x128xf32, #tpu.memory_space<vmem>>, vector<8x128xf32>
      tpu.vector_store %arg3[%c0_18, %c0_19], %34 {strides = array<i32>} : memref<8x128xf32, #tpu.memory_space<vmem>>, vector<8x128xf32>,
    } else {
    }
    %c0 = arith.constant 0 : index
    %c0_1 = arith.constant 0 : index
    %c0_2 = arith.constant 0 : index
    %3 = vector.load %arg2[%c0, %c0_1, %c0_2] : memref<6x8x128xf32, #tpu.memory_space<vmem>>, vector<1x8x128xf32>
    %4 = vector.shape_cast %3 : vector<1x8x128xf32> to vector<8x128xf32>
    %c1 = arith.constant 1 : index
    %c0_3 = arith.constant 0 : index
    %c0_4 = arith.constant 0 : index
    %5 = vector.load %arg2[%c1, %c0_3, %c0_4] : memref<6x8x128xf32, #tpu.memory_space<vmem>>, vector<1x8x128xf32>
    %6 = vector.shape_cast %5 : vector<1x8x128xf32> to vector<8x128xf32>
    %c2 = arith.constant 2 : index
    %c0_5 = arith.constant 0 : index
    %c0_6 = arith.constant 0 : index
    %7 = vector.load %arg2[%c2, %c0_5, %c0_6] : memref<6x8x128xf32, #tpu.memory_space<vmem>>, vector<1x8x128xf32>
    %8 = vector.shape_cast %7 : vector<1x8x128xf32> to vector<8x128xf32>
    %c4 = arith.constant 4 : index
    %c0_7 = arith.constant 0 : index
    %c0_8 = arith.constant 0 : index
    %9 = vector.load %arg2[%c4, %c0_7, %c0_8] : memref<6x8x128xf32, #tpu.memory_space<vmem>>, vector<1x8x128xf32>
    %10 = vector.shape_cast %9 : vector<1x8x128xf32> to vector<8x128xf32>
    %c5 = arith.constant 5 : index
    %c0_9 = arith.constant 0 : index
    %c0_10 = arith.constant 0 : index
    %11 = vector.load %arg2[%c5, %c0_9, %c0_10] : memref<6x8x128xf32, #tpu.memory_space<vmem>>, vector<1x8x128xf32>
    %12 = vector.shape_cast %11 : vector<1x8x128xf32> to vector<8x128xf32>
    %13 = arith.mulf %8, %12 : vector<8x128xf32>
    %cst = arith.constant 1.000000e+00 : f32
    %14 = vector.broadcast %cst : f32 to vector<8x128xf32>
    %15 = arith.divf %14, %13 : vector<8x128xf32>
    %16 = arith.mulf %12, %4 : vector<8x128xf32>
    %17 = arith.mulf %16, %15 : vector<8x128xf32>
    %18 = arith.mulf %8, %6 : vector<8x128xf32>
    %19 = arith.mulf %10, %4 : vector<8x128xf32>
    %20 = arith.subf %18, %19 : vector<8x128xf32>
    %21 = arith.mulf %20, %15 : vector<8x128xf32>
    %22 = arith.mulf %17, %17 : vector<8x128xf32>
    %23 = arith.mulf %21, %21 : vector<8x128xf32>
    %24 = arith.addf %22, %23 : vector<8x128xf32>
    %25 = math.log %13 : vector<8x128xf32>
    %cst_11 = arith.constant 2.000000e+00 : f32
    %26 = vector.broadcast %cst_11 : f32 to vector<8x128xf32>
    %27 = arith.mulf %26, %25 : vector<8x128xf32>
    %28 = arith.addf %24, %27 : vector<8x128xf32>
    %c0_12 = arith.constant 0 : index
    %c0_13 = arith.constant 0 : index
    %29 = vector.load %arg3[%c0_12, %c0_13] : memref<8x128xf32, #tpu.memory_space<vmem>>, vector<8x128xf32>
    %30 = vector.shape_cast %28 : vector<8x128xf32> to vector<1x8x128xf32>
    %cst_14 = arith.constant dense<0.000000e+00> : vector<8x128xf32>
    %31 = vector.multi_reduction <add>, %30, %cst_14 [0] : vector<1x8x128xf32> to vector<8x128xf32>
    %32 = arith.addf %29, %31 : vector<8x128xf32>
    %c0_15 = arith.constant 0 : index
    %c0_16 = arith.constant 0 : index
    %33 = vector.load %arg3[%c0_15, %c0_16] : memref<8x128xf32, #tpu.memory_space<vmem>>, vector<8x128xf32>
    tpu.vector_store %arg3[%c0_15, %c0_16], %32 {strides = array<i32>} : memref<8x128xf32, #tpu.memory_space<vmem>>, vector<8x128xf32>,
    return
  }
  func.func @transform_0(%arg0: i32, %arg1: i32) -> (i32, i32, i32) {
    %c1_i32 = arith.constant 1 : i32
    %0 = arith.muli %arg0, %c1_i32 : i32
    %1 = arith.addi %0, %arg1 : i32
    %c0_i32 = arith.constant 0 : i32
    %c0_i32_0 = arith.constant 0 : i32
    %c0_i32_1 = arith.constant 0 : i32
    return %c0_i32, %1, %c0_i32_0 : i32, i32, i32
  }
  func.func @transform_1(%arg0: i32, %arg1: i32) -> (i32, i32) {
    %c0_i32 = arith.constant 0 : i32
    %c0_i32_0 = arith.constant 0 : i32
    return %arg0, %c0_i32 : i32, i32
  }
}

</mosaic_0001>

<llo_original>
// kernel: tpu_custom_call.1
$region0: #{tpu_custom_call.1}
  #allocation0 [shape = 'u32[]', space=smem, size = 0x4, offset = 0x4, fixed_abs, tag = 'smem constant byte address 0x4 - core index']
  #allocation1 [shape = 'u32[72,128]{1,0:T(1,128)}', space=vmem, size = 0x9000, scoped, tag = 'internal scratch']
  %s0 = inlined_call_operand.hbm [shape: f32[6,8,128], index: 0, kind: input, shape index: {}]
  %s1 = inlined_call_operand.hbm [shape: f32[8,128], index: 1, kind: output, shape index: {}]
  %s2 = sld [smem:[#allocation0]]
  $region22: #{tpu_custom_call.1} parent=0
    _
  %s4 = ssub.s32 1, %s2
  %s5 = scalar_select 0, %s4, %s2
  $region1: #{tpu_custom_call.1} parent=0
    #allocation2 [shape = 'u8[24576]{0}', space=vmem, size = 0x6000, scoped, tag = 'input window, operand 0, single buffered']
    #allocation3 [shape = 's32[1]{0}', space=sflag, size = 0x4, scoped, tag = 'scoped memory for tpu_custom_call.1']
    #allocation4 [shape = 's32[1]{0}', space=sflag, size = 0x4, scoped, tag = 'scoped memory for tpu_custom_call.1']
    #allocation5 [shape = 'u8[4096]{0}', space=vmem, size = 0x1000, scoped, tag = 'output window, operand 0, single buffered']
    %6 = vsyncpa [#allocation3], 0
    %7 = vsyncpa [#allocation4], 0
    // Predicated region
    $region2: #{tpu_custom_call.1} parent=1 // pred_check
      _
    $region3: #{tpu_custom_call.1} parent=1 // pred_check_branch
      %9 = sbr.rel (0) target = $region5
    $region4: #{tpu_custom_call.1} parent=1 // pred_region
      %s10 = sadd.s32 0, 0
      %12 = vsyncadd [#allocation3], 0
      %s13 = smul.addr %s10, 8
      %s14 = scalar_lea.hbm %s0, %s13
      %s15 = sshll.u32 %s14, 4
      %s16 = int_to_ptr.hbm [resolvable:$true] %s15
      %s17 = sshll.u32 [#allocation2], 4
      %s18 = int_to_ptr.vmem [resolvable:$true] %s17
      %23 = dma.hbm_to_vmem [thread:$0]  %s16, 768, %s18, [#allocation3], 128, 128, 8
    $region5: #{tpu_custom_call.1} parent=1 // pred_fallthru
      _
    // Predicated region
    $region6: #{tpu_custom_call.1} parent=1 // pred_check
      _
    $region7: #{tpu_custom_call.1} parent=1 // pred_check_branch
      %25 = sbr.rel (0) target = $region9
    $region8: #{tpu_custom_call.1} parent=1 // pred_region
      %27 = dma.done [#allocation3], 768
    $region9: #{tpu_custom_call.1} parent=1 // pred_fallthru
      _
    %s28 = sadd.s32 0, 0
    %p29 = scmp.eq.s32.totalorder 0, 0
    // Predicated region
    $region10: #{tpu_custom_call.1} parent=1 // pred_check
      %p30 = pneg %p29
    $region11: #{tpu_custom_call.1} parent=1 // pred_check_branch
      %32 = sbr.rel (%p30) target = $region13
    $region12: #{tpu_custom_call.1} parent=1 // pred_region
      %33 = vst [vmem:[#allocation5] sm:$0xff] 0.0
    $region13: #{tpu_custom_call.1} parent=1 // pred_fallthru
      _
    %v34 = vld [vmem:[#allocation2] sm:$0xff]
    %s35 = scalar_lea.vmem [#allocation2], 8
    %v36 = vld [vmem:[%s35] sm:$0xff]
    %s37 = scalar_lea.vmem [#allocation2], 16
    %v38 = vld [vmem:[%s37] sm:$0xff]
    %s39 = scalar_lea.vmem [#allocation2], 32
    %v40 = vld [vmem:[%s39] sm:$0xff]
    %s41 = scalar_lea.vmem [#allocation2], 40
    %v42 = vld [vmem:[%s41] sm:$0xff]
    %v43 = vmul.f32 %v38, %v42
    %v44 = vrcp.pop %v43
    %v45 = vmul.f32 %v43, %v44
    %v46 = vsub.f32 1.0, %v45
    %v47 = vmul.f32 %v44, %v46
    %v48 = vadd.f32 %v44, %v47
    %vm49 = vweird.f32 %v43
    %vm50 = vweird.f32 %v44
    %vm51 = vmor %vm49, %vm50
    %v52 = vsel %vm51, %v44, %v48
    %v53 = vand.u32 2147483647, %v43
    %vm54 = vcmp.eq.f32.partialorder %v53, 8.507059e+37
    %v55 = vand.u32 %v43, 2147483648
    %v56 = vor.u32 1.1754944e-38, %v55
    %v57 = vsel %vm54, %v56, %v52
    %v58 = vmul.f32 1.0, %v57
    %v59 = vmul.f32 %v42, %v34
    %v60 = vmul.f32 %v59, %v58
    %v61 = vmul.f32 %v38, %v36
    %v62 = vmul.f32 %v40, %v34
    %v63 = vsub.f32 %v61, %v62
    %v64 = vmul.f32 %v63, %v58
    %v65 = vmul.f32 %v60, %v60
    %v66 = vmul.f32 %v64, %v64
    %v67 = vadd.f32 %v65, %v66
    %v68 = vlog2.pop %v43
    %v69 = vmul.f32 %v68, 0.6931472
    %v70 = vmul.f32 %v69, 2.0
    %v71 = vadd.f32 %v67, %v70
    %v72 = vld [vmem:[#allocation5] sm:$0xff]
    %v73 = vadd.f32 %v71, 0.0
    %v74 = vadd.f32 %v72, %v73
    %75 = vst [vmem:[#allocation5] sm:$0xff] %v74
    // Predicated region
    $region14: #{tpu_custom_call.1} parent=1 // pred_check
      _
    $region15: #{tpu_custom_call.1} parent=1 // pred_check_branch
      %77 = sbr.rel (0) target = $region17
    $region16: #{tpu_custom_call.1} parent=1 // pred_region
      %79 = vsyncadd [#allocation4], 0
      %s81 = sshll.u32 [#allocation5], 4
      %s82 = int_to_ptr.vmem [resolvable:$true] %s81
      %s83 = sshll.u32 %s1, 4
      %s84 = int_to_ptr.hbm [resolvable:$true] %s83
      %86 = dma.vmem_to_hbm [thread:$0]  %s82, 128, %s84, [#allocation4]
    $region17: #{tpu_custom_call.1} parent=1 // pred_fallthru
      _
    // Predicated region
    $region18: #{tpu_custom_call.1} parent=1 // pred_check
      _
    $region19: #{tpu_custom_call.1} parent=1 // pred_check_branch
      %88 = sbr.rel (0) target = $region21
    $region20: #{tpu_custom_call.1} parent=1 // pred_region
      %90 = dma.done [#allocation4], 128
    $region21: #{tpu_custom_call.1} parent=1 // pred_fallthru
      _
    %91 = vsyncpa [#allocation3], 1
    %92 = vsyncpa [#allocation4], 1

</llo_original>
